<compile_context>
chip_gen: v7x
topology: tpu7x:2x2x1
jax: 0.10.0
libtpu: 0.0.40
codegen_flags: <defaults>
</compile_context>

<pallas_src>
import functools

import jax
import jax.numpy as jnp
from jax.experimental import pallas as pl
from jax.experimental.pallas import tpu as pltpu


_OUT_LANES = 128                 # lane-dense fused output slab -> one unmasked store
# lane 0 = intersection, lane 1 = union, lane 2 = nonzero count (rest zero)

_IN_BLOCK_BYTE_BUDGET = 8 * 1024 * 1024   # both input blocks together (~4 MiB each)
_VMEM_LIMIT_BYTES = 32 * 1024 * 1024      # 2 inputs x 2 buffers x 4 MiB + slack;
                                          # safe on v5e/v6e (128 MiB) and v7x (64 MiB)
_SMALL_PROBLEM_BYTES = 2 * 1024 * 1024    # below this, XLA fusion beats pallas dispatch


def _round_up(x, m):
    return ((x + m - 1) // m) * m


def _pick_tr(r):
    """Row tile: multiple of 8 (or the full dim), <=7 wasted rows, and >=2 row
    blocks whenever possible so the 'parallel' axis splits across v7x cores."""
    if r <= 8:
        return r                                   # full-dim exception
    r8 = _round_up(r, 8)
    for cand in (32, 24, 16, 8):
        if r8 % cand == 0 and -(-r // cand) >= 2:
            return cand
    return 8


def _pick_ts(s, tr, in_itemsize, budget_bytes):
    """Lane tile: multiple of 128 (or the full dim), byte-budget/dtype aware,
    preferring divisors of round_up(S,128) so interior blocks stay full."""
    limit = max(128, ((budget_bytes // (tr * in_itemsize)) // 128) * 128)
    if s <= limit:
        return s                                   # whole spatial dim per block
    units = _round_up(s, 128) // 128
    lim_u = limit // 128
    best, d = 1, 1
    while d * d <= units:
        if units % d == 0:
            for cand in (d, units // d):
                if cand <= lim_u:
                    best = max(best, cand)
        d += 1
    if 2 * best >= lim_u:                          # divisor close enough to budget
        return best * 128
    return lim_u * 128                             # ragged tail masked in-kernel


def _dice_reduce_kernel(out_ref, tgt_ref, acc_ref, *, ts, s_valid):
    """Partial dice reductions for one (TR, TS) tile, accumulated over S."""
    k = pl.program_id(1)                           # spatial reduction axis (last)

    @pl.when(k == 0)
    def _init():
        acc_ref[...] = jnp.zeros_like(acc_ref)

    # DMA moves the native dtype; upcast after the load so compute is f32.
    o = out_ref[...].astype(jnp.float32)           # (TR, TS)
    t = tgt_ref[...].astype(jnp.float32)           # (TR, TS)

    if s_valid is not None:
        # Ragged lane tail: out-of-bounds lanes of the final block hold garbage.
        # Zero them before the reductions (zeros are neutral for all three).
        col = k * ts + jax.lax.broadcasted_iota(jnp.int32, o.shape, 1)
        in_bounds = col < s_valid
        o = jnp.where(in_bounds, o, 0.0)
        t = jnp.where(in_bounds, t, 0.0)

    pred = jnp.round(o)                            # round-half-even == torch.round

    # NOTE: on v7x (VPU-bound regime) these axis-1 sums could be offloaded to
    # the idle MXU via dot with one-hot column matrices; kept on the VPU here
    # since v5e/v6e are HBM-bound and the demo shapes are tiny.
    inter = jnp.sum(pred * t, axis=1, keepdims=True)                     # (TR, 1)
    union = jnp.sum(pred + t, axis=1, keepdims=True)                     # (TR, 1)
    nz = jnp.sum((t != 0.0).astype(jnp.float32), axis=1, keepdims=True)  # (TR, 1)

    # Fuse the three per-row scalars into one lane-dense (TR, 128) slab so the
    # kernel issues a single unmasked output store / writeback DMA per block.
    lane = jax.lax.broadcasted_iota(jnp.int32, acc_ref.shape, 1)
    partial = jnp.where(lane == 0, inter,
              jnp.where(lane == 1, union,
              jnp.where(lane == 2, nz, 0.0)))
    acc_ref[...] += partial


def _dice_sums_pallas(output, target, block_byte_budget=_IN_BLOCK_BYTE_BUDGET):
    """Per-(n, c) intersection / union / nonzero-count via a Pallas reduction."""
    n, c, h, w = output.shape
    r, s = n * c, h * w

    out2 = output.reshape(r, s)                    # row-major NCHW view, no pad
    tgt2 = target.reshape(r, s)

    tr = _pick_tr(r)
    in_itemsize = out2.dtype.itemsize + tgt2.dtype.itemsize
    ts = _pick_ts(s, tr, in_itemsize, block_byte_budget)

    grid_i = pl.cdiv(r, tr)
    grid_k = pl.cdiv(s, ts)
    out_rows = grid_i * tr                         # ragged row tail discarded below

    kernel = functools.partial(
        _dice_reduce_kernel, ts=ts, s_valid=(s if s % ts != 0 else None))

    cost = pl.CostEstimate(
        flops=6 * r * s,
        transcendentals=0,
        bytes_accessed=r * s * in_itemsize + out_rows * _OUT_LANES * 4,
    )

    sums = pl.pallas_call(
        kernel,
        grid=(grid_i, grid_k),                     # rows parallel, S reduction last
        in_specs=[pl.BlockSpec((tr, ts), lambda i, k: (i, k)),
                  pl.BlockSpec((tr, ts), lambda i, k: (i, k))],
        out_specs=pl.BlockSpec((tr, _OUT_LANES), lambda i, k: (i, 0)),
        out_shape=jax.ShapeDtypeStruct((out_rows, _OUT_LANES), jnp.float32),
        compiler_params=pltpu.CompilerParams(
            dimension_semantics=("parallel", "arbitrary"),
            vmem_limit_bytes=_VMEM_LIMIT_BYTES),
        cost_estimate=cost,
    )(out2, tgt2)

    inter = sums[:r, 0].reshape(n, c)
    union = sums[:r, 1].reshape(n, c)
    nz = sums[:r, 2].reshape(n, c)
    return inter, union, nz


def _dice_sums_xla(output, target):
    """Small-problem fast path: plain XLA fusion beats pallas_call dispatch."""
    pred = jnp.round(output.astype(jnp.float32))
    tgt = target.astype(jnp.float32)
    inter = jnp.sum(pred * tgt, axis=(2, 3))
    union = jnp.sum(pred + tgt, axis=(2, 3))
    nz = jnp.sum((tgt != 0.0).astype(jnp.float32), axis=(2, 3))
    return inter, union, nz


def weighted_dice_loss(output, target, *, weights=(1, 1), smooth=1e-07,
                       force_pallas=False,
                       block_byte_budget=_IN_BLOCK_BYTE_BUDGET):
    """JAX/Pallas equivalent of weightedDiceLoss.forward (NCHW inputs).

    Mirrors the torch module exactly, including the (N,) * (N, C) broadcast of
    loss_weights, which only type-checks when N == C (or C == 1).
    """
    total_bytes = (output.size * output.dtype.itemsize
                   + target.size * target.dtype.itemsize)
    if force_pallas or total_bytes > _SMALL_PROBLEM_BYTES:
        inter, union, nz = _dice_sums_pallas(output, target, block_byte_budget)
    else:
        inter, union, nz = _dice_sums_xla(output, target)

    # ---- tiny O(N*C) tail, mirrors the torch code exactly ----
    loss = 1.0 - (2.0 * inter + smooth) / (union + smooth)
    w_arr = jnp.asarray(weights, dtype=jnp.float32)
    target_labels = (jnp.sum(nz, axis=1) > 0.0).astype(jnp.int32)  # clamp(max=1)
    loss_weights = w_arr[target_labels]                            # (N,)
    return jnp.mean(loss_weights * loss)


def _reference(output, target, weights=(1, 1), smooth=1e-07):
    """Pure-JAX transcription of the PyTorch forward, for validation."""
    pred = jnp.round(output)
    inter = jnp.sum(pred * target, axis=(2, 3))
    union = jnp.sum(pred + target, axis=(2, 3))
    loss = 1.0 - (2.0 * inter + smooth) / (union + smooth)
    w_arr = jnp.asarray(weights, dtype=jnp.float32)
    labels = jnp.minimum(jnp.count_nonzero(target, axis=(1, 2, 3)), 1)
    loss_weights = w_arr[labels]
    return jnp.mean(loss_weights * loss)


if __name__ == "__main__":
    key = jax.random.PRNGKey(0)
    k1, k2, k3, k4 = jax.random.split(key, 4)

    # ---- Case 1: aligned shapes, N == C so the (N,)*(N,C) broadcast is valid.
    N, C, H, W = 4, 4, 16, 16
    output = jax.random.uniform(k1, (N, C, H, W), dtype=jnp.float32,
                                minval=0.0, maxval=1.0)
    target = (jax.random.uniform(k2, (N, C, H, W), dtype=jnp.float32)
              > 0.5).astype(jnp.float32)

    loss_pallas = jax.block_until_ready(
        weighted_dice_loss(output, target, force_pallas=True))
    loss_auto = jax.block_until_ready(weighted_dice_loss(output, target))
    ref = jax.block_until_ready(_reference(output, target))

    assert jnp.isfinite(loss_pallas), "kernel produced non-finite loss"
    assert jnp.allclose(loss_pallas, ref, rtol=1e-5, atol=1e-6), (loss_pallas, ref)
    assert jnp.allclose(loss_auto, ref, rtol=1e-5, atol=1e-6), (loss_auto, ref)

    # ---- Case 2: ragged rows (R=9) and ragged lane tiles (S=324, forced small
    # block budget) to exercise the no-pad / in-kernel-mask paths.
    N2, C2, H2, W2 = 3, 3, 18, 18
    output2 = jax.random.uniform(k3, (N2, C2, H2, W2), dtype=jnp.float32)
    target2 = (jax.random.uniform(k4, (N2, C2, H2, W2), dtype=jnp.float32)
               > 0.5).astype(jnp.float32)

    loss_ragged = jax.block_until_ready(
        weighted_dice_loss(output2, target2, force_pallas=True,
                           block_byte_budget=8 * 1024))
    ref2 = jax.block_until_ready(_reference(output2, target2))
    assert jnp.allclose(loss_ragged, ref2, rtol=1e-5, atol=1e-6), (loss_ragged, ref2)

    print("KERNEL_OK")
</pallas_src>

<mosaic_0001>
module attributes {stable_mosaic.version = 11 : i64} {
  func.func @_dice_reduce_kernel(%arg0: i32, %arg1: i32, %arg2: memref<8x256xf32, #tpu.memory_space<vmem>>, %arg3: memref<8x256xf32, #tpu.memory_space<vmem>>, %arg4: memref<8x128xf32, #tpu.memory_space<vmem>>) attributes {dimension_semantics = [#tpu.dimension_semantics<parallel>, #tpu.dimension_semantics<arbitrary>], iteration_bounds = array<i64: 2, 1>, scalar_prefetch = 0 : i64, scratch_operands = 0 : i64, tpu.core_type = #tpu.core_type<tc>, window_params = [{transform_indices = @transform_0, window_bounds = array<i64: 8, 256>}, {transform_indices = @transform_1, window_bounds = array<i64: 8, 256>}, {transform_indices = @transform_2, window_bounds = array<i64: 8, 128>}]} {
    %c0_i32 = arith.constant 0 : i32
    %0 = arith.cmpi eq, %arg1, %c0_i32 : i32
    %1 = arith.extui %0 : i1 to i32
    %c0_i32_0 = arith.constant 0 : i32
    %2 = arith.cmpi ne, %1, %c0_i32_0 : i32
    scf.if %2 {
      %cst_13 = arith.constant 0.000000e+00 : f32
      %38 = vector.broadcast %cst_13 : f32 to vector<8x128xf32>
      %c0_14 = arith.constant 0 : index
      %c0_15 = arith.constant 0 : index
      %39 = vector.load %arg4[%c0_14, %c0_15] : memref<8x128xf32, #tpu.memory_space<vmem>>, vector<8x128xf32>
      tpu.vector_store %arg4[%c0_14, %c0_15], %38 {strides = array<i32>} : memref<8x128xf32, #tpu.memory_space<vmem>>, vector<8x128xf32>,
    } else {
    }
    %c0 = arith.constant 0 : index
    %c0_1 = arith.constant 0 : index
    %3 = vector.load %arg2[%c0, %c0_1] : memref<8x256xf32, #tpu.memory_space<vmem>>, vector<8x256xf32>
    %c0_2 = arith.constant 0 : index
    %c0_3 = arith.constant 0 : index
    %4 = vector.load %arg3[%c0_2, %c0_3] : memref<8x256xf32, #tpu.memory_space<vmem>>, vector<8x256xf32>
    %5 = math.roundeven %3 : vector<8x256xf32>
    %6 = arith.mulf %5, %4 : vector<8x256xf32>
    %cst = arith.constant dense<0.000000e+00> : vector<8xf32>
    %7 = vector.multi_reduction <add>, %6, %cst [1] : vector<8x256xf32> to vector<8xf32>
    %8 = vector.shape_cast %7 : vector<8xf32> to vector<8x1xf32>
    %9 = arith.addf %5, %4 : vector<8x256xf32>
    %cst_4 = arith.constant dense<0.000000e+00> : vector<8xf32>
    %10 = vector.multi_reduction <add>, %9, %cst_4 [1] : vector<8x256xf32> to vector<8xf32>
    %11 = vector.shape_cast %10 : vector<8xf32> to vector<8x1xf32>
    %cst_5 = arith.constant 0.000000e+00 : f32
    %12 = vector.broadcast %cst_5 : f32 to vector<8x256xf32>
    %13 = arith.cmpf one, %4, %12 : vector<8x256xf32>
    %14 = arith.extui %13 : vector<8x256xi1> to vector<8x256xi32>
    %15 = arith.sitofp %14 : vector<8x256xi32> to vector<8x256xf32>
    %cst_6 = arith.constant dense<0.000000e+00> : vector<8xf32>
    %16 = vector.multi_reduction <add>, %15, %cst_6 [1] : vector<8x256xf32> to vector<8xf32>
    %17 = vector.shape_cast %16 : vector<8xf32> to vector<8x1xf32>
    %18 = tpu.iota {dimensions = array<i32: 1>} : vector<8x128xi32>
    %c0_i32_7 = arith.constant 0 : i32
    %19 = vector.broadcast %c0_i32_7 : i32 to vector<8x128xi32>
    %20 = arith.cmpi eq, %18, %19 : vector<8x128xi32>
    %c1_i32 = arith.constant 1 : i32
    %21 = vector.broadcast %c1_i32 : i32 to vector<8x128xi32>
    %22 = arith.cmpi eq, %18, %21 : vector<8x128xi32>
    %c2_i32 = arith.constant 2 : i32
    %23 = vector.broadcast %c2_i32 : i32 to vector<8x128xi32>
    %24 = arith.cmpi eq, %18, %23 : vector<8x128xi32>
    %cst_8 = arith.constant 0.000000e+00 : f32
    %25 = vector.shape_cast %17 : vector<8x1xf32> to vector<8x1xf32>
    %26 = vector.broadcast %25 : vector<8x1xf32> to vector<8x128xf32>
    %27 = vector.broadcast %cst_8 : f32 to vector<8x128xf32>
    %28 = arith.select %24, %26, %27 : vector<8x128xi1>, vector<8x128xf32>
    %29 = vector.shape_cast %11 : vector<8x1xf32> to vector<8x1xf32>
    %30 = vector.broadcast %29 : vector<8x1xf32> to vector<8x128xf32>
    %31 = arith.select %22, %30, %28 : vector<8x128xi1>, vector<8x128xf32>
    %32 = vector.shape_cast %8 : vector<8x1xf32> to vector<8x1xf32>
    %33 = vector.broadcast %32 : vector<8x1xf32> to vector<8x128xf32>
    %34 = arith.select %20, %33, %31 : vector<8x128xi1>, vector<8x128xf32>
    %c0_9 = arith.constant 0 : index
    %c0_10 = arith.constant 0 : index
    %35 = vector.load %arg4[%c0_9, %c0_10] : memref<8x128xf32, #tpu.memory_space<vmem>>, vector<8x128xf32>
    %36 = arith.addf %35, %34 : vector<8x128xf32>
    %c0_11 = arith.constant 0 : index
    %c0_12 = arith.constant 0 : index
    %37 = vector.load %arg4[%c0_11, %c0_12] : memref<8x128xf32, #tpu.memory_space<vmem>>, vector<8x128xf32>
    tpu.vector_store %arg4[%c0_11, %c0_12], %36 {strides = array<i32>} : memref<8x128xf32, #tpu.memory_space<vmem>>, vector<8x128xf32>,
    return
  }
  func.func @transform_0(%arg0: i32, %arg1: i32) -> (i32, i32) {
    %c0_i32 = arith.constant 0 : i32
    return %arg0, %arg1 : i32, i32
  }
  func.func @transform_1(%arg0: i32, %arg1: i32) -> (i32, i32) {
    %c0_i32 = arith.constant 0 : i32
    return %arg0, %arg1 : i32, i32
  }
  func.func @transform_2(%arg0: i32, %arg1: i32) -> (i32, i32) {
    %c0_i32 = arith.constant 0 : i32
    %c0_i32_0 = arith.constant 0 : i32
    return %arg0, %c0_i32 : i32, i32
  }
}

</mosaic_0001>

<llo_original>
// kernel: tpu_custom_call.1
$region0: #{tpu_custom_call.1}
  #allocation0 [shape = 'u32[]', space=smem, size = 0x4, offset = 0x4, fixed_abs, tag = 'smem constant byte address 0x4 - core index']
  #allocation1 [shape = 'u32[144,128]{1,0:T(1,128)}', space=vmem, size = 0x12000, scoped, tag = 'internal scratch']
  %s0 = inlined_call_operand.hbm [shape: f32[16,256], index: 0, kind: input, shape index: {}]
  %s1 = inlined_call_operand.hbm [shape: f32[16,256], index: 1, kind: input, shape index: {}]
  %s2 = inlined_call_operand.hbm [shape: f32[16,128], index: 2, kind: output, shape index: {}]
  %s3 = sld [smem:[#allocation0]]
  $region53: #{tpu_custom_call.1} parent=0
    _
  %s5 = ssub.s32 1, %s3
  %s6 = scalar_select 0, %s5, %s3
  $region1: #{tpu_custom_call.1} parent=0
    #allocation2 [shape = 'u8[16384]{0}', space=vmem, size = 0x4000, scoped, tag = 'input window, operand 0']
    #allocation3 [shape = 's32[2]{0}', space=sflag, size = 0x8, scoped, tag = 'scoped memory for tpu_custom_call.1']
    #allocation4 [shape = 's32[2]{0}', space=sflag, size = 0x8, scoped, tag = 'scoped memory for tpu_custom_call.1']
    #allocation5 [shape = 'u8[16384]{0}', space=vmem, size = 0x4000, scoped, tag = 'input window, operand 1']
    #allocation6 [shape = 's32[2]{0}', space=sflag, size = 0x8, scoped, tag = 'scoped memory for tpu_custom_call.1']
    #allocation7 [shape = 'u8[8192]{0}', space=vmem, size = 0x2000, scoped, tag = 'output window, operand 0']
    %7 = vsyncpa [#allocation3], 0
    %s8 = scalar_lea.sflag [#allocation3], 1
    %9 = vsyncpa %s8, 0
    %10 = vsyncpa [#allocation6], 0
    %s11 = scalar_lea.sflag [#allocation6], 1
    %12 = vsyncpa %s11, 0
    %13 = vsyncpa [#allocation4], 0
    %s14 = scalar_lea.sflag [#allocation4], 1
    %15 = vsyncpa %s14, 0
    loop: start=0, step=1, limit=4
    $region2: #{tpu_custom_call.1} parent=1 // loop_pre_header
      _
    $region3: #{tpu_custom_call.1} parent=1 // loop_header
      %s17 = sphi 0, %s21
      %p18 = scmp.ge.s32.totalorder %s17, 4
      %s24 = sphi 0, %s36
      %s25 = sphi 0, %s32
      %s26 = sphi 0, %s24
      %s27 = sphi 0, %s25
      %s28 = sphi 0, %s26
      %s29 = sphi 0, %s27
      %s41 = sphi 0, %s43
      %s44 = sphi 0, %s41
      %s45 = sphi 0, %s44
      %s61 = sphi 0, %s45
      %s69 = sphi 0, %s71
      %s72 = sphi 0, %s69
      %s73 = sphi 0, %s72
      %s89 = sphi 0, %s73
      %s95 = sphi 0, %s97
      %s98 = sphi 0, %s95
      %s99 = sphi 0, %s98
      %s115 = sphi 0, %s99
    $region4: #{tpu_custom_call.1} parent=1 // loop_header_branch
      %20 = sbr.rel (%p18) target = $region8
    $region5: #{tpu_custom_call.1} parent=1 // loop_body
      %s22 = ssub.s32 %s17, 1
      %s23 = ssub.s32 %s17, 2
      %s30 = sadd.s32 1, %s25
      %p31 = scmp.ge.s32.totalorder %s30, 1
      %s32 = scalar_select %p31, 0, %s30
      %s33 = sadd.s32 1, %s24
      %s34 = scalar_select %p31, %s33, %s24
      %p35 = scmp.ge.s32.totalorder %s34, 2
      %s36 = scalar_select %p35, 0, %s34
      %s37 = ssub.s32 %s24, %s36
      %s38 = ssub.s32 %s25, %s32
      %s39 = sor.u32 %s37, %s38
      %p40 = scmp.eq.s32.totalorder %s39, 0
      %s42 = sadd.s32 %s41, 1
      %s43 = scalar_select %p40, %s41, %s42
      %p46 = pneg %p40
      %p47 = scmp.eq.s32.totalorder %s17, 1
      %p48 = por %p46, %p47
      %p49 = scmp.ne.s32.totalorder %s41, %s44
      %p50 = scmp.eq.s32.totalorder %s17, 0
      %p51 = por %p49, %p50
      %p52 = scmp.ne.s32.totalorder %s41, %s44
      %p53 = scmp.eq.s32.totalorder %s22, 1
      %p54 = por %p52, %p53
      %p55 = scmp.ne.s32.totalorder %s44, %s45
      %p56 = scmp.eq.s32.totalorder %s22, 0
      %p57 = por %p55, %p56
      %p58 = scmp.ne.s32.totalorder %s44, %s45
      %p59 = scmp.eq.s32.totalorder %s23, 1
      %p60 = por %p58, %p59
      %p62 = scmp.ne.s32.totalorder %s45, %s61
      %p63 = scmp.eq.s32.totalorder %s23, 0
      %p64 = por %p62, %p63
      %s65 = ssub.s32 %s24, %s36
      %s66 = ssub.s32 %s25, %s32
      %s67 = sor.u32 %s65, %s66
      %p68 = scmp.eq.s32.totalorder %s67, 0
      %s70 = sadd.s32 %s69, 1
      %s71 = scalar_select %p68, %s69, %s70
      %p74 = pneg %p68
      %p75 = scmp.eq.s32.totalorder %s17, 1
      %p76 = por %p74, %p75
      %p77 = scmp.ne.s32.totalorder %s69, %s72
      %p78 = scmp.eq.s32.totalorder %s17, 0
      %p79 = por %p77, %p78
      %p80 = scmp.ne.s32.totalorder %s69, %s72
      %p81 = scmp.eq.s32.totalorder %s22, 1
      %p82 = por %p80, %p81
      %p83 = scmp.ne.s32.totalorder %s72, %s73
      %p84 = scmp.eq.s32.totalorder %s22, 0
      %p85 = por %p83, %p84
      %p86 = scmp.ne.s32.totalorder %s72, %s73
      %p87 = scmp.eq.s32.totalorder %s23, 1
      %p88 = por %p86, %p87
      %p90 = scmp.ne.s32.totalorder %s73, %s89
      %p91 = scmp.eq.s32.totalorder %s23, 0
      %p92 = por %p90, %p91
      %s93 = ssub.s32 %s24, %s36
      %p94 = scmp.eq.s32.totalorder %s93, 0
      %s96 = sadd.s32 %s95, 1
      %s97 = scalar_select %p94, %s95, %s96
      %p100 = pneg %p94
      %p101 = scmp.eq.s32.totalorder %s17, 1
      %p102 = por %p100, %p101
      %p103 = scmp.ne.s32.totalorder %s95, %s98
      %p104 = scmp.eq.s32.totalorder %s17, 0
      %p105 = por %p103, %p104
      %p106 = scmp.ne.s32.totalorder %s95, %s98
      %p107 = scmp.eq.s32.totalorder %s22, 1
      %p108 = por %p106, %p107
      %p109 = scmp.ne.s32.totalorder %s98, %s99
      %p110 = scmp.eq.s32.totalorder %s22, 0
      %p111 = por %p109, %p110
      %p112 = scmp.ne.s32.totalorder %s98, %s99
      %p113 = scmp.eq.s32.totalorder %s23, 1
      %p114 = por %p112, %p113
      %p116 = scmp.ne.s32.totalorder %s99, %s115
      %p117 = scmp.eq.s32.totalorder %s23, 0
      %p118 = por %p116, %p117
      %p119 = scmp.le.s32.totalorder 1, %s17
      %p120 = scmp.lt.s32.totalorder %s17, 3
      %p121 = pnand %p119, %p120
      %p122 = pneg %p121
      // Predicated region
      $region9: #{tpu_custom_call.1} parent=5 // pred_check
        _
      $region10: #{tpu_custom_call.1} parent=5 // pred_check_branch
        %124 = sbr.rel (%p121) target = $region12
      $region11: #{tpu_custom_call.1} parent=5 // pred_region
        %s125 = ssub.s32 %s17, 1
      $region12: #{tpu_custom_call.1} parent=5 // pred_fallthru
        _
      %p126 = scmp.lt.s32.totalorder %s17, 2
      // Predicated region
      $region13: #{tpu_custom_call.1} parent=5 // pred_check
        %p127 = pneg %p126
      $region14: #{tpu_custom_call.1} parent=5 // pred_check_branch
        %129 = sbr.rel (%p127) target = $region16
      $region15: #{tpu_custom_call.1} parent=5 // pred_region
        // Predicated region
        $region17: #{tpu_custom_call.1} parent=15 // pred_check
          %p130 = pneg %p51
        $region18: #{tpu_custom_call.1} parent=15 // pred_check_branch
          %132 = sbr.rel (%p130) target = $region20
        $region19: #{tpu_custom_call.1} parent=15 // pred_region
          %s133 = sand.u32 %s41, 1
          %s134 = scalar_lea.sflag [#allocation3], %s133
          %s135 = sand.u32 %s41, 1
          %s136 = smul.addr %s135, 16
          %s137 = scalar_lea.vmem [#allocation2], %s136
          %s138 = smul.u32 2, %s25
          %s140 = ssub.s32 256, 256
          %141 = vsyncadd %s134, %s140
          %s142 = smul.addr %s24, 2
          %s143 = sadd.s32 %s138, %s142
          %s144 = smul.addr %s143, 128
          %s145 = scalar_lea.hbm %s0, %s144
          %s147 = sshll.u32 %s137, 4
          %s148 = int_to_ptr.vmem [resolvable:$true] %s147
          %150 = dma.hbm_to_vmem [thread:$0]  %s145, 256, %s148, %s134
        $region20: #{tpu_custom_call.1} parent=15 // pred_fallthru
          _
        // Predicated region
        $region21: #{tpu_custom_call.1} parent=15 // pred_check
          %p151 = pneg %p79
        $region22: #{tpu_custom_call.1} parent=15 // pred_check_branch
          %153 = sbr.rel (%p151) target = $region24
        $region23: #{tpu_custom_call.1} parent=15 // pred_region
          %s154 = sand.u32 %s69, 1
          %s155 = scalar_lea.sflag [#allocation6], %s154
          %s156 = sand.u32 %s69, 1
          %s157 = smul.addr %s156, 16
          %s158 = scalar_lea.vmem [#allocation5], %s157
          %s159 = smul.u32 2, %s25
          %s161 = ssub.s32 256, 256
          %162 = vsyncadd %s155, %s161
          %s163 = smul.addr %s24, 2
          %s164 = sadd.s32 %s159, %s163
          %s165 = smul.addr %s164, 128
          %s166 = scalar_lea.hbm %s1, %s165
          %s168 = sshll.u32 %s158, 4
          %s169 = int_to_ptr.vmem [resolvable:$true] %s168
          %171 = dma.hbm_to_vmem [thread:$0]  %s166, 256, %s169, %s155
        $region24: #{tpu_custom_call.1} parent=15 // pred_fallthru
          _
      $region16: #{tpu_custom_call.1} parent=5 // pred_fallthru
        _
      %p172 = scmp.le.s32.totalorder 1, %s17
      %p173 = scmp.lt.s32.totalorder %s17, 3
      %p174 = pnand %p172, %p173
      %p175 = pneg %p174
      // Predicated region
      $region25: #{tpu_custom_call.1} parent=5 // pred_check
        _
      $region26: #{tpu_custom_call.1} parent=5 // pred_check_branch
        %177 = sbr.rel (%p174) target = $region28
      $region27: #{tpu_custom_call.1} parent=5 // pred_region
        %s178 = ssub.s32 %s17, 1
        %s179 = sand.u32 %s44, 1
        %s180 = scalar_lea.sflag [#allocation3], %s179
        %s181 = sand.u32 %s44, 1
        %s182 = smul.addr %s181, 16
        %s183 = scalar_lea.vmem [#allocation2], %s182
        // Predicated region
        $region29: #{tpu_custom_call.1} parent=27 // pred_check
          %p184 = pneg %p57
        $region30: #{tpu_custom_call.1} parent=27 // pred_check_branch
          %186 = sbr.rel (%p184) target = $region32
        $region31: #{tpu_custom_call.1} parent=27 // pred_region
          %187 = dma.done %s180, 256
        $region32: #{tpu_custom_call.1} parent=27 // pred_fallthru
          _
        %s188 = sand.u32 %s72, 1
        %s189 = scalar_lea.sflag [#allocation6], %s188
        %s190 = sand.u32 %s72, 1
        %s191 = smul.addr %s190, 16
        %s192 = scalar_lea.vmem [#allocation5], %s191
        // Predicated region
        $region33: #{tpu_custom_call.1} parent=27 // pred_check
          %p193 = pneg %p85
        $region34: #{tpu_custom_call.1} parent=27 // pred_check_branch
          %195 = sbr.rel (%p193) target = $region36
        $region35: #{tpu_custom_call.1} parent=27 // pred_region
          %196 = dma.done %s189, 256
        $region36: #{tpu_custom_call.1} parent=27 // pred_fallthru
          _
        %s197 = sand.u32 %s44, 1
        %s198 = scalar_lea.sflag [#allocation3], %s197
        %s199 = sand.u32 %s44, 1
        %s200 = smul.addr %s199, 16
        %s201 = scalar_lea.vmem [#allocation2], %s200
        %p202 = pneg %p57
        %p203 = pneg %p54
        %s204 = sand.u32 %s72, 1
        %s205 = scalar_lea.sflag [#allocation6], %s204
        %s206 = sand.u32 %s72, 1
        %s207 = smul.addr %s206, 16
        %s208 = scalar_lea.vmem [#allocation5], %s207
        %p209 = pneg %p85
        %p210 = pneg %p82
        %p211 = pneg %p111
        %p212 = pneg %p108
        %s213 = sand.u32 %s98, 1
        %s214 = scalar_lea.sflag [#allocation4], %s213
        %s215 = sand.u32 %s98, 1
        %s216 = smul.addr %s215, 8
        %s217 = scalar_lea.vmem [#allocation7], %s216
        %s218 = smul.u32 2, %s27
        %s219 = smul.u32 2, %s27
        %p220 = scmp.eq.s32.totalorder %s27, 0
        // Predicated region
        $region37: #{tpu_custom_call.1} parent=27 // pred_check
          %p221 = pneg %p220
        $region38: #{tpu_custom_call.1} parent=27 // pred_check_branch
          %223 = sbr.rel (%p221) target = $region40
        $region39: #{tpu_custom_call.1} parent=27 // pred_region
          %224 = vst [vmem:[%s217] sm:$0xff] 0.0
        $region40: #{tpu_custom_call.1} parent=27 // pred_fallthru
          _
        %v225 = vld [vmem:[%s183] sm:$0xff]
        %v226 = vld [vmem:[%s183 + $0x8] sm:$0xff]
        %v227 = vld [vmem:[%s192] sm:$0xff]
        %v228 = vld [vmem:[%s192 + $0x8] sm:$0xff]
        %v229 = vround.ne.pseudo %v225
        %v230 = vround.ne.pseudo %v226
        %v231 = vmul.f32 %v229, %v227
        %v232 = vmul.f32 %v230, %v228
        %v233 = vadd.f32 %v231, %v232
        %234 = vadd.xlane.f32.xlu0 %v233
        %v235 = vpop.xlane.xlu0 %234
        %v236 = vadd.f32 %v229, %v227
        %v237 = vadd.f32 %v230, %v228
        %v238 = vadd.f32 %v236, %v237
        %239 = vadd.xlane.f32.xlu0 %v238
        %v240 = vpop.xlane.xlu0 %239
        %vm241 = vcmp.ne.f32.partialorder %v227, 0.0
        %vm242 = vcmp.ne.f32.partialorder %v228, 0.0
        %v243 = vsel %vm241, 1, 0
        %v244 = vsel %vm242, 1, 0
        %v245 = vcvt.s32.f32 %v243
        %v246 = vcvt.s32.f32 %v244
        %v247 = vadd.f32 %v245, %v246
        %248 = vadd.xlane.f32.xlu0 %v247
        %v249 = vpop.xlane.xlu0 %248
        %v250 = vlaneseq
        %v251 = vand.u32 %v250, 127
        %vm252 = vcmp.eq.s32.totalorder %v251, 0
        %vm253 = vcmp.eq.s32.totalorder %v251, 1
        %vm254 = vcmp.eq.s32.totalorder %v251, 2
        %v255 = vsel %vm254, %v249, 0.0
        %v256 = vsel %vm253, %v240, %v255
        %v257 = vsel %vm252, %v235, %v256
        %v258 = vld [vmem:[%s217] sm:$0xff]
        %v259 = vadd.f32 %v258, %v257
        %260 = vst [vmem:[%s217] sm:$0xff] %v259
        %s261 = sand.u32 %s98, 1
        %s262 = scalar_lea.sflag [#allocation4], %s261
        %s263 = sand.u32 %s98, 1
        %s264 = smul.addr %s263, 8
        %s265 = scalar_lea.vmem [#allocation7], %s264
        // Predicated region
        $region41: #{tpu_custom_call.1} parent=27 // pred_check
          %p266 = pneg %p108
        $region42: #{tpu_custom_call.1} parent=27 // pred_check_branch
          %268 = sbr.rel (%p266) target = $region44
        $region43: #{tpu_custom_call.1} parent=27 // pred_region
          %s270 = ssub.s32 128, 128
          %271 = vsyncadd %s262, %s270
          %s272 = smul.addr %s26, 128
          %s273 = scalar_lea.hbm %s2, %s272
          %s275 = sshll.u32 %s265, 4
          %s276 = int_to_ptr.vmem [resolvable:$true] %s275
          %278 = dma.vmem_to_hbm [thread:$0]  %s276, 128, %s273, %s262
        $region44: #{tpu_custom_call.1} parent=27 // pred_fallthru
          _
      $region28: #{tpu_custom_call.1} parent=5 // pred_fallthru
        _
      %p279 = scmp.le.s32.totalorder 2, %s17
      // Predicated region
      $region45: #{tpu_custom_call.1} parent=5 // pred_check
        %p280 = pneg %p279
      $region46: #{tpu_custom_call.1} parent=5 // pred_check_branch
        %282 = sbr.rel (%p280) target = $region48
      $region47: #{tpu_custom_call.1} parent=5 // pred_region
        %s283 = ssub.s32 %s17, 2
        // Predicated region
        $region49: #{tpu_custom_call.1} parent=47 // pred_check
          %p284 = pneg %p114
        $region50: #{tpu_custom_call.1} parent=47 // pred_check_branch
          %286 = sbr.rel (%p284) target = $region52
        $region51: #{tpu_custom_call.1} parent=47 // pred_region
          %s287 = sand.u32 %s99, 1
          %s288 = scalar_lea.sflag [#allocation4], %s287
          %s289 = sand.u32 %s99, 1
          %s290 = smul.addr %s289, 8
          %s291 = scalar_lea.vmem [#allocation7], %s290
          %292 = dma.done %s288, 128
        $region52: #{tpu_custom_call.1} parent=47 // pred_fallthru
          _
      $region48: #{tpu_custom_call.1} parent=5 // pred_fallthru
        _
    $region6: #{tpu_custom_call.1} parent=1 // loop_footer
      %s21 = sadd.s32 1, %s17
    $region7: #{tpu_custom_call.1} parent=1 // loop_footer_branch
      %16 = sbr.rel target = $region3
    $region8: #{tpu_custom_call.1} parent=1 // loop_exit
      _
    %293 = vsyncpa [#allocation3], 1
    %s294 = scalar_lea.sflag [#allocation3], 1
    %295 = vsyncpa %s294, 1
    %296 = vsyncpa [#allocation6], 1
    %s297 = scalar_lea.sflag [#allocation6], 1
    %298 = vsyncpa %s297, 1
    %299 = vsyncpa [#allocation4], 1
    %s300 = scalar_lea.sflag [#allocation4], 1
    %301 = vsyncpa %s300, 1

</llo_original>
